<compile_context>
chip_gen: v7x
topology: tpu7x:2x2x1
jax: 0.10.0
libtpu: 0.0.40
codegen_flags: <defaults>
</compile_context>

<pallas_src>
import functools

import jax
import jax.numpy as jnp
from jax.experimental import pallas as pl
from jax.experimental.pallas import tpu as pltpu


def _round_up(x: int, m: int) -> int:
    return ((x + m - 1) // m) * m


def _cdiv(a: int, b: int) -> int:
    return (a + b - 1) // b


def _sublane_multiple(dtype) -> int:
    # 8 rows per 32-bit vreg sublane; sub-32-bit dtypes pack along sublanes.
    return max(8, 32 // jnp.dtype(dtype).itemsize)


def _device_vmem_bytes() -> int:
    try:
        return int(pltpu.get_tpu_info().vmem_capacity_bytes)
    except Exception:
        return 64 * 1024 * 1024  # conservative: v7x per-TensorCore VMEM


def _pick_intermediate_tile(I: int, block_intermediate: int) -> int:
    # Multiple of 256 (v6e/v7x 256x256 MXU), clamped to the padded I.
    tI = max(256, (block_intermediate // 256) * 256)
    return min(tI, _round_up(I, 256))


def pack_qwen2_mlp_weights(w_gate_up, w_down, tI: int):
    """Pre-shuffle the merged [H, 2I] gate/up weight so gate-tile-k and
    up-tile-k are column-adjacent ([H, nI * 2*tI], block k = [gate_k | up_k]),
    and zero-pad the intermediate dim to a multiple of tI.  Padded gate/up
    columns produce silu(0)*0 = 0, and the matching w_down rows are zero, so
    padding never changes the result.  Call this ONCE offline for serving."""
    H, two_I = w_gate_up.shape
    I = two_I // 2
    I_pad = _round_up(I, tI)
    gate = w_gate_up[:, :I]
    up = w_gate_up[:, I:]
    if I_pad != I:
        gate = jnp.pad(gate, ((0, 0), (0, I_pad - I)))
        up = jnp.pad(up, ((0, 0), (0, I_pad - I)))
        w_down = jnp.pad(w_down, ((0, I_pad - I), (0, 0)))
    nI = I_pad // tI
    packed = jnp.concatenate(
        [gate.reshape(H, nI, tI), up.reshape(H, nI, tI)], axis=-1
    ).reshape(H, 2 * I_pad)
    return packed, w_down


def qwen2_mlp_kernel(x_ref, wgu_ref, wd_ref, o_ref, acc_ref):
    """One (token tile i, intermediate tile k) step of the fused MLP.

    x_ref   : [tm, H]     token tile (resident across the k axis)
    wgu_ref : [H, 2*tI]   packed [gate_k | up_k] column tile
    wd_ref  : [tI, H]     down-projection row tile
    o_ref   : [tm, H]     output tile (written on the last k step)
    acc_ref : [tm, H]     f32 accumulator scratch
    """
    k = pl.program_id(1)

    @pl.when(k == 0)
    def _init():
        acc_ref[...] = jnp.zeros_like(acc_ref)

    # Single fused gate+up matmul: native-dtype operands, f32 MXU accumulation.
    gu = jnp.dot(x_ref[...], wgu_ref[...], preferred_element_type=jnp.float32)
    tI = gu.shape[1] // 2
    gate, up = gu[:, :tI], gu[:, tI:]

    # SiluAndMul in f32, then back to weight dtype for the down-proj MXU pass.
    act = (gate * jax.nn.sigmoid(gate) * up).astype(wd_ref.dtype)
    acc_ref[...] += jnp.dot(act, wd_ref[...], preferred_element_type=jnp.float32)

    @pl.when(k == pl.num_programs(1) - 1)
    def _finalize():
        o_ref[...] = acc_ref[...].astype(o_ref.dtype)


@functools.partial(jax.jit, static_argnames=("tI", "block_tokens"))
def qwen2_mlp_packed(x, w_gu_packed, w_down_pad, *, tI: int, block_tokens: int = 512):
    """x: [T, H], w_gu_packed: [H, 2*I_pad] (from pack_qwen2_mlp_weights),
    w_down_pad: [I_pad, H] -> [T, H]."""
    T, H = x.shape
    I_pad, H2 = w_down_pad.shape
    assert H2 == H and w_gu_packed.shape == (H, 2 * I_pad) and I_pad % tI == 0
    nI = I_pad // tI

    x_isz = jnp.dtype(x.dtype).itemsize
    w_isz = jnp.dtype(w_gu_packed.dtype).itemsize
    sub = _sublane_multiple(x.dtype)

    # Token tile: sized per call so ragged T wastes little padding, and forced
    # to the dtype's sublane multiple so Mosaic's (8/16,128) constraint holds.
    n_tok_tiles = max(1, _cdiv(T, max(block_tokens, sub)))
    tm = _round_up(_cdiv(T, n_tok_tiles), sub)

    # VMEM: double-buffered x / weight / output tiles + f32 accumulator.
    def _est(tm_):
        return (2 * tm_ * H * x_isz          # double-buffered x tiles
                + 2 * 3 * H * tI * w_isz     # double-buffered gate_up + down tiles
                + 2 * tm_ * H * x_isz        # double-buffered output tiles
                + tm_ * H * 4)               # f32 accumulator

    vmem_cap = _device_vmem_bytes()
    while _est(tm) > int(0.9 * vmem_cap) and tm > sub:
        tm = max(sub, _round_up(tm // 2, sub))
    vmem_limit = min(int(_est(tm) * 1.2) + (8 << 20), vmem_cap)

    T_pad = _round_up(T, tm)
    if T_pad != T:
        x = jnp.pad(x, ((0, T_pad - T), (0, 0)))

    # NOTE: for decode-shaped T on v7x (single token tile), splitting the k
    # axis across the two TensorCores with per-core partial accumulators would
    # avoid both cores re-streaming the full weight set; not implemented here.
    out = pl.pallas_call(
        qwen2_mlp_kernel,
        out_shape=jax.ShapeDtypeStruct((T_pad, H), x.dtype),
        grid_spec=pltpu.PrefetchScalarGridSpec(
            num_scalar_prefetch=0,
            grid=(T_pad // tm, nI),
            in_specs=[
                pl.BlockSpec((tm, H), lambda i, k: (i, 0)),       # x tile (resident over k)
                pl.BlockSpec((H, 2 * tI), lambda i, k: (0, k)),   # packed [gate_k | up_k]
                pl.BlockSpec((tI, H), lambda i, k: (k, 0)),       # down-proj rows
            ],
            out_specs=pl.BlockSpec((tm, H), lambda i, k: (i, 0)),
            scratch_shapes=[pltpu.VMEM((tm, H), jnp.float32)],
        ),
        compiler_params=pltpu.CompilerParams(
            dimension_semantics=("parallel", "arbitrary"),
            vmem_limit_bytes=vmem_limit,
        ),
    )(x, w_gu_packed, w_down_pad)

    if T_pad != T:
        out = out[:T]
    return out


@functools.partial(jax.jit, static_argnames=("block_tokens", "block_intermediate"))
def qwen2_mlp(x, w_gate_up, w_down, *, block_tokens=512, block_intermediate=512):
    """Convenience entry: x: [T, H], w_gate_up: [H, 2I] (columns [gate | up]),
    w_down: [I, H] -> [T, H].  Packs weights per call; for serving, run
    pack_qwen2_mlp_weights once offline and call qwen2_mlp_packed directly."""
    T, H = x.shape
    I = w_down.shape[0]
    assert w_gate_up.shape == (H, 2 * I) and w_down.shape == (I, H)
    tI = _pick_intermediate_tile(I, block_intermediate)
    w_gu_packed, w_down_pad = pack_qwen2_mlp_weights(w_gate_up, w_down, tI)
    return qwen2_mlp_packed(x, w_gu_packed, w_down_pad, tI=tI, block_tokens=block_tokens)


def qwen2_mlp_reference(x, w_gate_up, w_down):
    """Plain-JAX f32 reference mirroring the PyTorch forward."""
    xf = x.astype(jnp.float32)
    wguf = w_gate_up.astype(jnp.float32)
    wdf = w_down.astype(jnp.float32)
    I = w_down.shape[0]
    gate_up = xf @ wguf
    gate, up = gate_up[:, :I], gate_up[:, I:]
    act = jax.nn.silu(gate) * up
    return act @ wdf


if __name__ == "__main__":
    # Small shapes consistent with the module; bf16 exercises the MXU path.
    num_tokens = 50          # ragged -> exercises token padding / per-call tm
    hidden_size = 256
    intermediate_size = 384  # not a multiple of 256 -> exercises I padding

    key = jax.random.PRNGKey(0)
    kx, kg, ku, kd = jax.random.split(key, 4)

    x = jax.random.normal(kx, (num_tokens, hidden_size), dtype=jnp.float32)
    w_gate = jax.random.normal(kg, (hidden_size, intermediate_size), dtype=jnp.float32) * 0.05
    w_up = jax.random.normal(ku, (hidden_size, intermediate_size), dtype=jnp.float32) * 0.05
    w_gate_up = jnp.concatenate([w_gate, w_up], axis=1)  # [H, 2I], columns [gate | up]
    w_down = jax.random.normal(kd, (intermediate_size, hidden_size), dtype=jnp.float32) * 0.05

    x_bf = x.astype(jnp.bfloat16)
    w_gate_up_bf = w_gate_up.astype(jnp.bfloat16)
    w_down_bf = w_down.astype(jnp.bfloat16)

    ref = qwen2_mlp_reference(x_bf, w_gate_up_bf, w_down_bf)

    # Small tiles: multi-step intermediate accumulation + token/I padding.
    out_small = qwen2_mlp(x_bf, w_gate_up_bf, w_down_bf,
                          block_tokens=32, block_intermediate=256)
    out_small = jax.block_until_ready(out_small)
    assert out_small.shape == (num_tokens, hidden_size)
    err_small = float(jnp.max(jnp.abs(out_small.astype(jnp.float32) - ref)))
    assert err_small < 5e-2, f"small-tile mismatch vs reference, max abs err = {err_small}"

    # Default (large) tiles: single k step, tile clamped to the padded I.
    out_default = qwen2_mlp(x_bf, w_gate_up_bf, w_down_bf)
    out_default = jax.block_until_ready(out_default)
    assert out_default.shape == (num_tokens, hidden_size)
    err_default = float(jnp.max(jnp.abs(out_default.astype(jnp.float32) - ref)))
    assert err_default < 5e-2, f"default-tile mismatch vs reference, max abs err = {err_default}"

    print("KERNEL_OK")
</pallas_src>

<mosaic_0001>
module attributes {stable_mosaic.version = 11 : i64} {
  func.func @qwen2_mlp_kernel(%arg0: i32, %arg1: i32, %arg2: memref<32x256xbf16, #tpu.memory_space<vmem>>, %arg3: memref<256x512xbf16, #tpu.memory_space<vmem>>, %arg4: memref<256x256xbf16, #tpu.memory_space<vmem>>, %arg5: memref<32x256xbf16, #tpu.memory_space<vmem>>, %arg6: memref<32x256xf32, #tpu.memory_space<vmem>>) attributes {dimension_semantics = [#tpu.dimension_semantics<parallel>, #tpu.dimension_semantics<arbitrary>], iteration_bounds = array<i64: 2, 2>, scalar_prefetch = 0 : i64, scratch_operands = 1 : i64, tpu.core_type = #tpu.core_type<tc>, window_params = [{transform_indices = @transform_0, window_bounds = array<i64: 32, 256>}, {transform_indices = @transform_1, window_bounds = array<i64: 256, 512>}, {transform_indices = @transform_2, window_bounds = array<i64: 256, 256>}, {transform_indices = @transform_3, window_bounds = array<i64: 32, 256>}]} {
    %c0_i32 = arith.constant 0 : i32
    %0 = arith.cmpi eq, %arg1, %c0_i32 : i32
    %1 = arith.extui %0 : i1 to i32
    %c0_i32_0 = arith.constant 0 : i32
    %2 = arith.cmpi ne, %1, %c0_i32_0 : i32
    scf.if %2 {
      %cst_13 = arith.constant 0.000000e+00 : f32
      %24 = vector.broadcast %cst_13 : f32 to vector<32x256xf32>
      %c0_14 = arith.constant 0 : index
      %c0_15 = arith.constant 0 : index
      %25 = vector.load %arg6[%c0_14, %c0_15] : memref<32x256xf32, #tpu.memory_space<vmem>>, vector<32x256xf32>
      tpu.vector_store %arg6[%c0_14, %c0_15], %24 {strides = array<i32>} : memref<32x256xf32, #tpu.memory_space<vmem>>, vector<32x256xf32>,
    } else {
    }
    %c0 = arith.constant 0 : index
    %c0_1 = arith.constant 0 : index
    %3 = vector.load %arg2[%c0, %c0_1] : memref<32x256xbf16, #tpu.memory_space<vmem>>, vector<32x256xbf16>
    %c0_2 = arith.constant 0 : index
    %c0_3 = arith.constant 0 : index
    %4 = vector.load %arg3[%c0_2, %c0_3] : memref<256x512xbf16, #tpu.memory_space<vmem>>, vector<256x512xbf16>
    %cst = arith.constant dense<0.000000e+00> : vector<32x512xf32>
    %5 = tpu.matmul %3, %4, %cst {dimension_numbers = #tpu.dot_dimension_numbers<[1], [0], [0], [1], [0, 0, 1, 1], [], []>} : vector<32x256xbf16>, vector<256x512xbf16>, vector<32x512xf32> -> vector<32x512xf32>
    %6 = vector.extract_strided_slice %5 {offsets = [0, 0], sizes = [32, 256], strides = [1, 1]} : vector<32x512xf32> to vector<32x256xf32>
    %7 = vector.extract_strided_slice %5 {offsets = [0, 256], sizes = [32, 256], strides = [1, 1]} : vector<32x512xf32> to vector<32x256xf32>
    %8 = arith.negf %6 : vector<32x256xf32>
    %9 = math.exp %8 : vector<32x256xf32>
    %cst_4 = arith.constant 1.000000e+00 : f32
    %10 = vector.broadcast %cst_4 : f32 to vector<32x256xf32>
    %11 = arith.addf %10, %9 : vector<32x256xf32>
    %12 = arith.divf %10, %11 : vector<32x256xf32>
    %13 = arith.mulf %6, %12 : vector<32x256xf32>
    %14 = arith.mulf %13, %7 : vector<32x256xf32>
    %15 = arith.truncf %14 : vector<32x256xf32> to vector<32x256xbf16>
    %c0_5 = arith.constant 0 : index
    %c0_6 = arith.constant 0 : index
    %16 = vector.load %arg6[%c0_5, %c0_6] : memref<32x256xf32, #tpu.memory_space<vmem>>, vector<32x256xf32>
    %c0_7 = arith.constant 0 : index
    %c0_8 = arith.constant 0 : index
    %17 = vector.load %arg4[%c0_7, %c0_8] : memref<256x256xbf16, #tpu.memory_space<vmem>>, vector<256x256xbf16>
    %cst_9 = arith.constant dense<0.000000e+00> : vector<32x256xf32>
    %18 = tpu.matmul %15, %17, %cst_9 {dimension_numbers = #tpu.dot_dimension_numbers<[1], [0], [0], [1], [0, 0, 1, 1], [], []>} : vector<32x256xbf16>, vector<256x256xbf16>, vector<32x256xf32> -> vector<32x256xf32>
    %19 = arith.addf %16, %18 : vector<32x256xf32>
    %c0_10 = arith.constant 0 : index
    %c0_11 = arith.constant 0 : index
    %20 = vector.load %arg6[%c0_10, %c0_11] : memref<32x256xf32, #tpu.memory_space<vmem>>, vector<32x256xf32>
    tpu.vector_store %arg6[%c0_10, %c0_11], %19 {strides = array<i32>} : memref<32x256xf32, #tpu.memory_space<vmem>>, vector<32x256xf32>,
    %c1_i32 = arith.constant 1 : i32
    %21 = arith.cmpi eq, %arg1, %c1_i32 : i32
    %22 = arith.extui %21 : i1 to i32
    %c0_i32_12 = arith.constant 0 : i32
    %23 = arith.cmpi ne, %22, %c0_i32_12 : i32
    scf.if %23 {
      %c0_13 = arith.constant 0 : index
      %c0_14 = arith.constant 0 : index
      %24 = vector.load %arg6[%c0_13, %c0_14] : memref<32x256xf32, #tpu.memory_space<vmem>>, vector<32x256xf32>
      %25 = arith.truncf %24 : vector<32x256xf32> to vector<32x256xbf16>
      %c0_15 = arith.constant 0 : index
      %c0_16 = arith.constant 0 : index
      %26 = vector.load %arg5[%c0_15, %c0_16] : memref<32x256xbf16, #tpu.memory_space<vmem>>, vector<32x256xbf16>
      tpu.vector_store %arg5[%c0_15, %c0_16], %25 {strides = array<i32>} : memref<32x256xbf16, #tpu.memory_space<vmem>>, vector<32x256xbf16>,
    } else {
    }
    return
  }
  func.func @transform_0(%arg0: i32, %arg1: i32) -> (i32, i32) {
    %c0_i32 = arith.constant 0 : i32
    %c0_i32_0 = arith.constant 0 : i32
    return %arg0, %c0_i32 : i32, i32
  }
  func.func @transform_1(%arg0: i32, %arg1: i32) -> (i32, i32) {
    %c0_i32 = arith.constant 0 : i32
    %c0_i32_0 = arith.constant 0 : i32
    return %c0_i32, %arg1 : i32, i32
  }
  func.func @transform_2(%arg0: i32, %arg1: i32) -> (i32, i32) {
    %c0_i32 = arith.constant 0 : i32
    %c0_i32_0 = arith.constant 0 : i32
    return %arg1, %c0_i32 : i32, i32
  }
  func.func @transform_3(%arg0: i32, %arg1: i32) -> (i32, i32) {
    %c0_i32 = arith.constant 0 : i32
    %c0_i32_0 = arith.constant 0 : i32
    return %arg0, %c0_i32 : i32, i32
  }
}

</mosaic_0001>

<llo_original>
// kernel: qwen2_mlp_packed.1
$region0: #{qwen2_mlp_packed.1}
  #allocation0 [shape = 'u32[]', space=smem, size = 0x4, offset = 0x4, fixed_abs, tag = 'smem constant byte address 0x4 - core index']
  #allocation1 [shape = 'u32[144,128]{1,0:T(1,128)}', space=vmem, size = 0x12000, scoped, tag = 'internal scratch']
  #allocation2 [shape = 'f32[32,256]{1,0:T(8,128)}', space=vmem, size = 0x8000, scoped, tag = 'scratch operand']
  %s0 = inlined_call_operand.vmem [shape: bf16[64,256], index: 0, kind: input, shape index: {}]
  %s1 = inlined_call_operand.hbm [shape: bf16[256,1024], index: 1, kind: input, shape index: {}]
  %s2 = inlined_call_operand.hbm [shape: bf16[512,256], index: 2, kind: input, shape index: {}]
  %s3 = inlined_call_operand.vmem [shape: bf16[64,256], index: 3, kind: output, shape index: {}]
  %s4 = sld [smem:[#allocation0]]
  $region61: #{qwen2_mlp_packed.1} parent=0
    _
  %s6 = ssub.s32 1, %s4
  %s7 = scalar_select 0, %s6, %s4
  $region1: #{qwen2_mlp_packed.1} parent=0
    #allocation3 [shape = 'u8[524288]{0}', space=vmem, size = 0x80000, scoped, tag = 'input window, operand 1']
    #allocation4 [shape = 's32[2]{0}', space=sflag, size = 0x8, scoped, tag = 'scoped memory for qwen2_mlp_packed.1']
    #allocation5 [shape = 'u8[262144]{0}', space=vmem, size = 0x40000, scoped, tag = 'input window, operand 2']
    #allocation6 [shape = 's32[2]{0}', space=sflag, size = 0x8, scoped, tag = 'scoped memory for qwen2_mlp_packed.1']
    %8 = vsyncpa [#allocation4], 0
    %s9 = scalar_lea.sflag [#allocation4], 1
    %10 = vsyncpa %s9, 0
    %11 = vsyncpa [#allocation6], 0
    %s12 = scalar_lea.sflag [#allocation6], 1
    %13 = vsyncpa %s12, 0
    loop: start=0, step=1, limit=6
    $region2: #{qwen2_mlp_packed.1} parent=1 // loop_pre_header
      _
    $region3: #{qwen2_mlp_packed.1} parent=1 // loop_header
      %s15 = sphi 0, %s19
      %p16 = scmp.ge.s32.totalorder %s15, 6
      %s22 = sphi 0, %s34
      %s23 = sphi 0, %s30
      %s24 = sphi 0, %s22
      %s25 = sphi 0, %s23
      %s26 = sphi 0, %s24
      %s27 = sphi 0, %s25
      %s37 = sphi 0, %s39
      %s40 = sphi 0, %s37
      %s41 = sphi 0, %s40
      %s57 = sphi 0, %s41
      %s63 = sphi 0, %s65
      %s66 = sphi 0, %s63
      %s67 = sphi 0, %s66
      %s83 = sphi 0, %s67
      %s89 = sphi 0, %s91
      %s92 = sphi 0, %s89
      %s93 = sphi 0, %s92
      %s109 = sphi 0, %s93
      %s115 = sphi 0, %s117
      %s118 = sphi 0, %s115
      %s119 = sphi 0, %s118
      %s135 = sphi 0, %s119
    $region4: #{qwen2_mlp_packed.1} parent=1 // loop_header_branch
      %18 = sbr.rel (%p16) target = $region8
    $region5: #{qwen2_mlp_packed.1} parent=1 // loop_body
      %s20 = ssub.s32 %s15, 1
      %s21 = ssub.s32 %s15, 2
      %s28 = sadd.s32 1, %s23
      %p29 = scmp.ge.s32.totalorder %s28, 2
      %s30 = scalar_select %p29, 0, %s28
      %s31 = sadd.s32 1, %s22
      %s32 = scalar_select %p29, %s31, %s22
      %p33 = scmp.ge.s32.totalorder %s32, 2
      %s34 = scalar_select %p33, 0, %s32
      %s35 = ssub.s32 %s22, %s34
      %p36 = scmp.eq.s32.totalorder %s35, 0
      %s38 = sadd.s32 %s37, 1
      %s39 = scalar_select %p36, %s37, %s38
      %p42 = pneg %p36
      %p43 = scmp.eq.s32.totalorder %s15, 3
      %p44 = por %p42, %p43
      %p45 = scmp.ne.s32.totalorder %s37, %s40
      %p46 = scmp.eq.s32.totalorder %s15, 0
      %p47 = por %p45, %p46
      %p48 = scmp.ne.s32.totalorder %s37, %s40
      %p49 = scmp.eq.s32.totalorder %s20, 3
      %p50 = por %p48, %p49
      %p51 = scmp.ne.s32.totalorder %s40, %s41
      %p52 = scmp.eq.s32.totalorder %s20, 0
      %p53 = por %p51, %p52
      %p54 = scmp.ne.s32.totalorder %s40, %s41
      %p55 = scmp.eq.s32.totalorder %s21, 3
      %p56 = por %p54, %p55
      %p58 = scmp.ne.s32.totalorder %s41, %s57
      %p59 = scmp.eq.s32.totalorder %s21, 0
      %p60 = por %p58, %p59
      %s61 = ssub.s32 %s23, %s30
      %p62 = scmp.eq.s32.totalorder %s61, 0
      %s64 = sadd.s32 %s63, 1
      %s65 = scalar_select %p62, %s63, %s64
      %p68 = pneg %p62
      %p69 = scmp.eq.s32.totalorder %s15, 3
      %p70 = por %p68, %p69
      %p71 = scmp.ne.s32.totalorder %s63, %s66
      %p72 = scmp.eq.s32.totalorder %s15, 0
      %p73 = por %p71, %p72
      %p74 = scmp.ne.s32.totalorder %s63, %s66
      %p75 = scmp.eq.s32.totalorder %s20, 3
      %p76 = por %p74, %p75
      %p77 = scmp.ne.s32.totalorder %s66, %s67
      %p78 = scmp.eq.s32.totalorder %s20, 0
      %p79 = por %p77, %p78
      %p80 = scmp.ne.s32.totalorder %s66, %s67
      %p81 = scmp.eq.s32.totalorder %s21, 3
      %p82 = por %p80, %p81
      %p84 = scmp.ne.s32.totalorder %s67, %s83
      %p85 = scmp.eq.s32.totalorder %s21, 0
      %p86 = por %p84, %p85
      %s87 = ssub.s32 %s23, %s30
      %p88 = scmp.eq.s32.totalorder %s87, 0
      %s90 = sadd.s32 %s89, 1
      %s91 = scalar_select %p88, %s89, %s90
      %p94 = pneg %p88
      %p95 = scmp.eq.s32.totalorder %s15, 3
      %p96 = por %p94, %p95
      %p97 = scmp.ne.s32.totalorder %s89, %s92
      %p98 = scmp.eq.s32.totalorder %s15, 0
      %p99 = por %p97, %p98
      %p100 = scmp.ne.s32.totalorder %s89, %s92
      %p101 = scmp.eq.s32.totalorder %s20, 3
      %p102 = por %p100, %p101
      %p103 = scmp.ne.s32.totalorder %s92, %s93
      %p104 = scmp.eq.s32.totalorder %s20, 0
      %p105 = por %p103, %p104
      %p106 = scmp.ne.s32.totalorder %s92, %s93
      %p107 = scmp.eq.s32.totalorder %s21, 3
      %p108 = por %p106, %p107
      %p110 = scmp.ne.s32.totalorder %s93, %s109
      %p111 = scmp.eq.s32.totalorder %s21, 0
      %p112 = por %p110, %p111
      %s113 = ssub.s32 %s22, %s34
      %p114 = scmp.eq.s32.totalorder %s113, 0
      %s116 = sadd.s32 %s115, 1
      %s117 = scalar_select %p114, %s115, %s116
      %p120 = pneg %p114
      %p121 = scmp.eq.s32.totalorder %s15, 3
      %p122 = por %p120, %p121
      %p123 = scmp.ne.s32.totalorder %s115, %s118
      %p124 = scmp.eq.s32.totalorder %s15, 0
      %p125 = por %p123, %p124
      %p126 = scmp.ne.s32.totalorder %s115, %s118
      %p127 = scmp.eq.s32.totalorder %s20, 3
      %p128 = por %p126, %p127
      %p129 = scmp.ne.s32.totalorder %s118, %s119
      %p130 = scmp.eq.s32.totalorder %s20, 0
      %p131 = por %p129, %p130
      %p132 = scmp.ne.s32.totalorder %s118, %s119
      %p133 = scmp.eq.s32.totalorder %s21, 3
      %p134 = por %p132, %p133
      %p136 = scmp.ne.s32.totalorder %s119, %s135
      %p137 = scmp.eq.s32.totalorder %s21, 0
      %p138 = por %p136, %p137
      %p139 = scmp.le.s32.totalorder 1, %s15
      %p140 = scmp.lt.s32.totalorder %s15, 5
      %p141 = pnand %p139, %p140
      %p142 = pneg %p141
      // Predicated region
      $region9: #{qwen2_mlp_packed.1} parent=5 // pred_check
        _
      $region10: #{qwen2_mlp_packed.1} parent=5 // pred_check_branch
        %144 = sbr.rel (%p141) target = $region12
      $region11: #{qwen2_mlp_packed.1} parent=5 // pred_region
        %s145 = ssub.s32 %s15, 1
      $region12: #{qwen2_mlp_packed.1} parent=5 // pred_fallthru
        _
      %p146 = scmp.lt.s32.totalorder %s15, 4
      // Predicated region
      $region13: #{qwen2_mlp_packed.1} parent=5 // pred_check
        %p147 = pneg %p146
      $region14: #{qwen2_mlp_packed.1} parent=5 // pred_check_branch
        %149 = sbr.rel (%p147) target = $region16
      $region15: #{qwen2_mlp_packed.1} parent=5 // pred_region
        // Predicated region
        $region17: #{qwen2_mlp_packed.1} parent=15 // pred_check
          %p150 = pneg %p47
        $region18: #{qwen2_mlp_packed.1} parent=15 // pred_check_branch
          %152 = sbr.rel (%p150) target = $region20
        $region19: #{qwen2_mlp_packed.1} parent=15 // pred_region
          %s153 = smul.u32 4, %s22
          %p154 = scmp.lt.s32.totalorder %s153, 7
          %s155 = scalar_select %p154, %s153, 7
          %s156 = smul.addr %s155, 2
          %s157 = smul.addr %s156, 4
          %s158 = scalar_lea.vmem %s0, %s157
          %s159 = smul.u32 4, %s22
        $region20: #{qwen2_mlp_packed.1} parent=15 // pred_fallthru
          _
        // Predicated region
        $region21: #{qwen2_mlp_packed.1} parent=15 // pred_check
          %p160 = pneg %p73
        $region22: #{qwen2_mlp_packed.1} parent=15 // pred_check_branch
          %162 = sbr.rel (%p160) target = $region24
        $region23: #{qwen2_mlp_packed.1} parent=15 // pred_region
          %s163 = sand.u32 %s63, 1
          %s164 = scalar_lea.sflag [#allocation4], %s163
          %s165 = sand.u32 %s63, 1
          %s166 = smul.addr %s165, 512
          %s167 = scalar_lea.vmem [#allocation3], %s166
          %s168 = smul.u32 4, %s23
          %s170 = ssub.s32 8192, 8192
          %171 = vsyncadd %s164, %s170
          %s172 = smul.addr %s168, 64
          %s173 = scalar_lea.hbm %s1, %s172
          %s174 = sshll.u32 %s167, 4
          %s175 = int_to_ptr.vmem [resolvable:$true] %s174
          %180 = dma.hbm_to_vmem [thread:$0]  %s173, 8192, %s175, %s164, 512, 256, 16
        $region24: #{qwen2_mlp_packed.1} parent=15 // pred_fallthru
          _
        // Predicated region
        $region25: #{qwen2_mlp_packed.1} parent=15 // pred_check
          %p181 = pneg %p99
        $region26: #{qwen2_mlp_packed.1} parent=15 // pred_check_branch
          %183 = sbr.rel (%p181) target = $region28
        $region27: #{qwen2_mlp_packed.1} parent=15 // pred_region
          %s184 = sand.u32 %s89, 1
          %s185 = scalar_lea.sflag [#allocation6], %s184
          %s186 = sand.u32 %s89, 1
          %s187 = smul.addr %s186, 256
          %s188 = scalar_lea.vmem [#allocation5], %s187
          %s189 = smul.u32 32, %s23
          %s191 = ssub.s32 4096, 4096
          %192 = vsyncadd %s185, %s191
          %s193 = smul.addr %s189, 2
          %s194 = smul.addr %s193, 64
          %s195 = scalar_lea.hbm %s2, %s194
          %s196 = sshll.u32 %s188, 4
          %s197 = int_to_ptr.vmem [resolvable:$true] %s196
          %202 = dma.hbm_to_vmem [thread:$0]  %s195, 4096, %s197, %s185, 128, 128, 8
        $region28: #{qwen2_mlp_packed.1} parent=15 // pred_fallthru
          _
      $region16: #{qwen2_mlp_packed.1} parent=5 // pred_fallthru
        _
      %p203 = scmp.le.s32.totalorder 1, %s15
      %p204 = scmp.lt.s32.totalorder %s15, 5
      %p205 = pnand %p203, %p204
      %p206 = pneg %p205
      // Predicated region
      $region29: #{qwen2_mlp_packed.1} parent=5 // pred_check
        _
      $region30: #{qwen2_mlp_packed.1} parent=5 // pred_check_branch
        %208 = sbr.rel (%p205) target = $region32
      $region31: #{qwen2_mlp_packed.1} parent=5 // pred_region
        %s209 = ssub.s32 %s15, 1
        %s210 = sand.u32 %s66, 1
        %s211 = scalar_lea.sflag [#allocation4], %s210
        %s212 = sand.u32 %s66, 1
        %s213 = smul.addr %s212, 512
        %s214 = scalar_lea.vmem [#allocation3], %s213
        // Predicated region
        $region33: #{qwen2_mlp_packed.1} parent=31 // pred_check
          %p215 = pneg %p79
        $region34: #{qwen2_mlp_packed.1} parent=31 // pred_check_branch
          %217 = sbr.rel (%p215) target = $region36
        $region35: #{qwen2_mlp_packed.1} parent=31 // pred_region
          %218 = dma.done %s211, 8192
        $region36: #{qwen2_mlp_packed.1} parent=31 // pred_fallthru
          _
        %s219 = sand.u32 %s92, 1
        %s220 = scalar_lea.sflag [#allocation6], %s219
        %s221 = sand.u32 %s92, 1
        %s222 = smul.addr %s221, 256
        %s223 = scalar_lea.vmem [#allocation5], %s222
        // Predicated region
        $region37: #{qwen2_mlp_packed.1} parent=31 // pred_check
          %p224 = pneg %p105
        $region38: #{qwen2_mlp_packed.1} parent=31 // pred_check_branch
          %226 = sbr.rel (%p224) target = $region40
        $region39: #{qwen2_mlp_packed.1} parent=31 // pred_region
          %227 = dma.done %s220, 4096
        $region40: #{qwen2_mlp_packed.1} parent=31 // pred_fallthru
          _
        %s228 = smul.u32 4, %s24
        %p229 = scmp.lt.s32.totalorder %s228, 7
        %s230 = scalar_select %p229, %s228, 7
        %s231 = smul.addr %s230, 2
        %s232 = smul.addr %s231, 4
        %s233 = scalar_lea.vmem %s0, %s232
        %p234 = pneg %p53
        %p235 = pneg %p50
        %s236 = sand.u32 %s66, 1
        %s237 = scalar_lea.sflag [#allocation4], %s236
        %s238 = sand.u32 %s66, 1
        %s239 = smul.addr %s238, 512
        %s240 = scalar_lea.vmem [#allocation3], %s239
        %p241 = pneg %p79
        %p242 = pneg %p76
        %s243 = sand.u32 %s92, 1
        %s244 = scalar_lea.sflag [#allocation6], %s243
        %s245 = sand.u32 %s92, 1
        %s246 = smul.addr %s245, 256
        %s247 = scalar_lea.vmem [#allocation5], %s246
        %p248 = pneg %p105
        %p249 = pneg %p102
        %p250 = pneg %p131
        %p251 = pneg %p128
        %s252 = smul.u32 4, %s24
        %p253 = scmp.lt.s32.totalorder %s252, 7
        %s254 = scalar_select %p253, %s252, 7
        %s255 = smul.addr %s254, 2
        %s256 = smul.addr %s255, 4
        %s257 = scalar_lea.vmem %s3, %s256
        %s258 = smul.u32 4, %s24
        %p259 = scmp.lt.s32.totalorder %s258, 7
        %s260 = scalar_select %p259, %s258, 7
        %s261 = smul.addr %s260, 2
        %s262 = smul.addr %s261, 4
        %s263 = scalar_lea.vmem %s0, %s262
        %s264 = smul.u32 4, %s24
        %s265 = smul.u32 4, %s25
        %s266 = smul.u32 32, %s25
        %s267 = smul.u32 4, %s24
        %p268 = scmp.lt.s32.totalorder %s267, 7
        %s269 = scalar_select %p268, %s267, 7
        %s270 = smul.addr %s269, 2
        %s271 = smul.addr %s270, 4
        %s272 = scalar_lea.vmem %s3, %s271
        %s273 = smul.u32 4, %s24
        %p274 = scmp.eq.s32.totalorder %s25, 0
        // Predicated region
        $region41: #{qwen2_mlp_packed.1} parent=31 // pred_check
          %p275 = pneg %p274
        $region42: #{qwen2_mlp_packed.1} parent=31 // pred_check_branch
          %277 = sbr.rel (%p275) target = $region44
        $region43: #{qwen2_mlp_packed.1} parent=31 // pred_region
          %278 = vst [vmem:[#allocation2] sm:$0xff] 0.0
          %279 = vst [vmem:[#allocation2 + $0x8] sm:$0xff] 0.0
          %280 = vst [vmem:[#allocation2 + $0x10] sm:$0xff] 0.0
          %281 = vst [vmem:[#allocation2 + $0x18] sm:$0xff] 0.0
          %282 = vst [vmem:[#allocation2 + $0x20] sm:$0xff] 0.0
          %283 = vst [vmem:[#allocation2 + $0x28] sm:$0xff] 0.0
          %284 = vst [vmem:[#allocation2 + $0x30] sm:$0xff] 0.0
          %285 = vst [vmem:[#allocation2 + $0x38] sm:$0xff] 0.0
        $region44: #{qwen2_mlp_packed.1} parent=31 // pred_fallthru
          _
        %v286 = vld [vmem:[%s263] sm:$0xff]
        %v287 = vld [vmem:[%s263 + $0x8] sm:$0xff]
        %v288 = vld [vmem:[%s263 + $0x10] sm:$0xff]
        %v289 = vld [vmem:[%s263 + $0x18] sm:$0xff]
        %v290 = vld [vmem:[%s214] sm:$0xff]
        %v291 = vld [vmem:[%s214 + $0x8] sm:$0xff]
        %v292 = vld [vmem:[%s214 + $0x10] sm:$0xff]
        %v293 = vld [vmem:[%s214 + $0x18] sm:$0xff]
        %v294 = vld [vmem:[%s214 + $0x20] sm:$0xff]
        %v295 = vld [vmem:[%s214 + $0x28] sm:$0xff]
        %v296 = vld [vmem:[%s214 + $0x30] sm:$0xff]
        %v297 = vld [vmem:[%s214 + $0x38] sm:$0xff]
        %v298 = vld [vmem:[%s214 + $0x40] sm:$0xff]
        %v299 = vld [vmem:[%s214 + $0x48] sm:$0xff]
        %v300 = vld [vmem:[%s214 + $0x50] sm:$0xff]
        %v301 = vld [vmem:[%s214 + $0x58] sm:$0xff]
        %v302 = vld [vmem:[%s214 + $0x60] sm:$0xff]
        %v303 = vld [vmem:[%s214 + $0x68] sm:$0xff]
        %v304 = vld [vmem:[%s214 + $0x70] sm:$0xff]
        %v305 = vld [vmem:[%s214 + $0x78] sm:$0xff]
        %v306 = vld [vmem:[%s214 + $0x80] sm:$0xff]
        %v307 = vld [vmem:[%s214 + $0x88] sm:$0xff]
        %v308 = vld [vmem:[%s214 + $0x90] sm:$0xff]
        %v309 = vld [vmem:[%s214 + $0x98] sm:$0xff]
        %v310 = vld [vmem:[%s214 + $0xa0] sm:$0xff]
        %v311 = vld [vmem:[%s214 + $0xa8] sm:$0xff]
        %v312 = vld [vmem:[%s214 + $0xb0] sm:$0xff]
        %v313 = vld [vmem:[%s214 + $0xb8] sm:$0xff]
        %v314 = vld [vmem:[%s214 + $0xc0] sm:$0xff]
        %v315 = vld [vmem:[%s214 + $0xc8] sm:$0xff]
        %v316 = vld [vmem:[%s214 + $0xd0] sm:$0xff]
        %v317 = vld [vmem:[%s214 + $0xd8] sm:$0xff]
        %v318 = vld [vmem:[%s214 + $0xe0] sm:$0xff]
        %v319 = vld [vmem:[%s214 + $0xe8] sm:$0xff]
        %v320 = vld [vmem:[%s214 + $0xf0] sm:$0xff]
        %v321 = vld [vmem:[%s214 + $0xf8] sm:$0xff]
        %v322 = vld [vmem:[%s214 + $0x100] sm:$0xff]
        %v323 = vld [vmem:[%s214 + $0x108] sm:$0xff]
        %v324 = vld [vmem:[%s214 + $0x110] sm:$0xff]
        %v325 = vld [vmem:[%s214 + $0x118] sm:$0xff]
        %v326 = vld [vmem:[%s214 + $0x120] sm:$0xff]
        %v327 = vld [vmem:[%s214 + $0x128] sm:$0xff]
        %v328 = vld [vmem:[%s214 + $0x130] sm:$0xff]
        %v329 = vld [vmem:[%s214 + $0x138] sm:$0xff]
        %v330 = vld [vmem:[%s214 + $0x140] sm:$0xff]
        %v331 = vld [vmem:[%s214 + $0x148] sm:$0xff]
        %v332 = vld [vmem:[%s214 + $0x150] sm:$0xff]
        %v333 = vld [vmem:[%s214 + $0x158] sm:$0xff]
        %v334 = vld [vmem:[%s214 + $0x160] sm:$0xff]
        %v335 = vld [vmem:[%s214 + $0x168] sm:$0xff]
        %v336 = vld [vmem:[%s214 + $0x170] sm:$0xff]
        %v337 = vld [vmem:[%s214 + $0x178] sm:$0xff]
        %v338 = vld [vmem:[%s214 + $0x180] sm:$0xff]
        %v339 = vld [vmem:[%s214 + $0x188] sm:$0xff]
        %v340 = vld [vmem:[%s214 + $0x190] sm:$0xff]
        %v341 = vld [vmem:[%s214 + $0x198] sm:$0xff]
        %v342 = vld [vmem:[%s214 + $0x1a0] sm:$0xff]
        %v343 = vld [vmem:[%s214 + $0x1a8] sm:$0xff]
        %v344 = vld [vmem:[%s214 + $0x1b0] sm:$0xff]
        %v345 = vld [vmem:[%s214 + $0x1b8] sm:$0xff]
        %v346 = vld [vmem:[%s214 + $0x1c0] sm:$0xff]
        %v347 = vld [vmem:[%s214 + $0x1c8] sm:$0xff]
        %v348 = vld [vmem:[%s214 + $0x1d0] sm:$0xff]
        %v349 = vld [vmem:[%s214 + $0x1d8] sm:$0xff]
        %v350 = vld [vmem:[%s214 + $0x1e0] sm:$0xff]
        %v351 = vld [vmem:[%s214 + $0x1e8] sm:$0xff]
        %v352 = vld [vmem:[%s214 + $0x1f0] sm:$0xff]
        %v353 = vld [vmem:[%s214 + $0x1f8] sm:$0xff]
        %v358 = vunpack.c.l.b16 %v286
        %v359 = vunpack.c.h.b16 %v286
        %v360 = vunpack.c.l.b16 %v287
        %v361 = vunpack.c.h.b16 %v287
        %v362 = vunpack.c.l.b16 %v288
        %v363 = vunpack.c.h.b16 %v288
        %v364 = vunpack.c.l.b16 %v289
        %v365 = vunpack.c.h.b16 %v289
        %v366 = vpack.c.b16 %v360, %v358
        %v367 = vpack.c.b16 %v361, %v359
        %v368 = vpack.c.b16 %v364, %v362
        %v369 = vpack.c.b16 %v365, %v363
        %v438 = vunpack.c.l.b16 %v290
        %v439 = vunpack.c.h.b16 %v290
        %v440 = vunpack.c.l.b16 %v291
        %v441 = vunpack.c.h.b16 %v291
        %v442 = vunpack.c.l.b16 %v292
        %v443 = vunpack.c.h.b16 %v292
        %v444 = vunpack.c.l.b16 %v293
        %v445 = vunpack.c.h.b16 %v293
        %v446 = vunpack.c.l.b16 %v294
        %v447 = vunpack.c.h.b16 %v294
        %v448 = vunpack.c.l.b16 %v295
        %v449 = vunpack.c.h.b16 %v295
        %v450 = vunpack.c.l.b16 %v296
        %v451 = vunpack.c.h.b16 %v296
        %v452 = vunpack.c.l.b16 %v297
        %v453 = vunpack.c.h.b16 %v297
        %v454 = vunpack.c.l.b16 %v298
        %v455 = vunpack.c.h.b16 %v298
        %v456 = vunpack.c.l.b16 %v299
        %v457 = vunpack.c.h.b16 %v299
        %v458 = vunpack.c.l.b16 %v300
        %v459 = vunpack.c.h.b16 %v300
        %v460 = vunpack.c.l.b16 %v301
        %v461 = vunpack.c.h.b16 %v301
        %v462 = vunpack.c.l.b16 %v302
        %v463 = vunpack.c.h.b16 %v302
        %v464 = vunpack.c.l.b16 %v303
        %v465 = vunpack.c.h.b16 %v303
        %v466 = vunpack.c.l.b16 %v304
        %v467 = vunpack.c.h.b16 %v304
        %v468 = vunpack.c.l.b16 %v305
        %v469 = vunpack.c.h.b16 %v305
        %v470 = vunpack.c.l.b16 %v306
        %v471 = vunpack.c.h.b16 %v306
        %v472 = vunpack.c.l.b16 %v307
        %v473 = vunpack.c.h.b16 %v307
        %v474 = vunpack.c.l.b16 %v308
        %v475 = vunpack.c.h.b16 %v308
        %v476 = vunpack.c.l.b16 %v309
        %v477 = vunpack.c.h.b16 %v309
        %v478 = vunpack.c.l.b16 %v310
        %v479 = vunpack.c.h.b16 %v310
        %v480 = vunpack.c.l.b16 %v311
        %v481 = vunpack.c.h.b16 %v311
        %v482 = vunpack.c.l.b16 %v312
        %v483 = vunpack.c.h.b16 %v312
        %v484 = vunpack.c.l.b16 %v313
        %v485 = vunpack.c.h.b16 %v313
        %v486 = vunpack.c.l.b16 %v314
        %v487 = vunpack.c.h.b16 %v314
        %v488 = vunpack.c.l.b16 %v315
        %v489 = vunpack.c.h.b16 %v315
        %v490 = vunpack.c.l.b16 %v316
        %v491 = vunpack.c.h.b16 %v316
        %v492 = vunpack.c.l.b16 %v317
        %v493 = vunpack.c.h.b16 %v317
        %v494 = vunpack.c.l.b16 %v318
        %v495 = vunpack.c.h.b16 %v318
        %v496 = vunpack.c.l.b16 %v319
        %v497 = vunpack.c.h.b16 %v319
        %v498 = vunpack.c.l.b16 %v320
        %v499 = vunpack.c.h.b16 %v320
        %v500 = vunpack.c.l.b16 %v321
        %v501 = vunpack.c.h.b16 %v321
        %v502 = vunpack.c.l.b16 %v322
        %v503 = vunpack.c.h.b16 %v322
        %v504 = vunpack.c.l.b16 %v323
        %v505 = vunpack.c.h.b16 %v323
        %v506 = vunpack.c.l.b16 %v324
        %v507 = vunpack.c.h.b16 %v324
        %v508 = vunpack.c.l.b16 %v325
        %v509 = vunpack.c.h.b16 %v325
        %v510 = vunpack.c.l.b16 %v326
        %v511 = vunpack.c.h.b16 %v326
        %v512 = vunpack.c.l.b16 %v327
        %v513 = vunpack.c.h.b16 %v327
        %v514 = vunpack.c.l.b16 %v328
        %v515 = vunpack.c.h.b16 %v328
        %v516 = vunpack.c.l.b16 %v329
        %v517 = vunpack.c.h.b16 %v329
        %v518 = vunpack.c.l.b16 %v330
        %v519 = vunpack.c.h.b16 %v330
        %v520 = vunpack.c.l.b16 %v331
        %v521 = vunpack.c.h.b16 %v331
        %v522 = vunpack.c.l.b16 %v332
        %v523 = vunpack.c.h.b16 %v332
        %v524 = vunpack.c.l.b16 %v333
        %v525 = vunpack.c.h.b16 %v333
        %v526 = vunpack.c.l.b16 %v334
        %v527 = vunpack.c.h.b16 %v334
        %v528 = vunpack.c.l.b16 %v335
        %v529 = vunpack.c.h.b16 %v335
        %v530 = vunpack.c.l.b16 %v336
        %v531 = vunpack.c.h.b16 %v336
        %v532 = vunpack.c.l.b16 %v337
        %v533 = vunpack.c.h.b16 %v337
        %v534 = vunpack.c.l.b16 %v338
        %v535 = vunpack.c.h.b16 %v338
        %v536 = vunpack.c.l.b16 %v339
        %v537 = vunpack.c.h.b16 %v339
        %v538 = vunpack.c.l.b16 %v340
        %v539 = vunpack.c.h.b16 %v340
        %v540 = vunpack.c.l.b16 %v341
        %v541 = vunpack.c.h.b16 %v341
        %v542 = vunpack.c.l.b16 %v342
        %v543 = vunpack.c.h.b16 %v342
        %v544 = vunpack.c.l.b16 %v343
        %v545 = vunpack.c.h.b16 %v343
        %v546 = vunpack.c.l.b16 %v344
        %v547 = vunpack.c.h.b16 %v344
        %v548 = vunpack.c.l.b16 %v345
        %v549 = vunpack.c.h.b16 %v345
        %v550 = vunpack.c.l.b16 %v346
        %v551 = vunpack.c.h.b16 %v346
        %v552 = vunpack.c.l.b16 %v347
        %v553 = vunpack.c.h.b16 %v347
        %v554 = vunpack.c.l.b16 %v348
        %v555 = vunpack.c.h.b16 %v348
        %v556 = vunpack.c.l.b16 %v349
        %v557 = vunpack.c.h.b16 %v349
        %v558 = vunpack.c.l.b16 %v350
        %v559 = vunpack.c.h.b16 %v350
        %v560 = vunpack.c.l.b16 %v351
        %v561 = vunpack.c.h.b16 %v351
        %v562 = vunpack.c.l.b16 %v352
        %v563 = vunpack.c.h.b16 %v352
        %v564 = vunpack.c.l.b16 %v353
        %v565 = vunpack.c.h.b16 %v353
        %v566 = vpack.c.b16 %v442, %v438
        %v567 = vpack.c.b16 %v443, %v439
        %v568 = vpack.c.b16 %v444, %v440
        %v569 = vpack.c.b16 %v445, %v441
        %v570 = vpack.c.b16 %v450, %v446
        %v571 = vpack.c.b16 %v451, %v447
        %v572 = vpack.c.b16 %v452, %v448
        %v573 = vpack.c.b16 %v453, %v449
        %v574 = vpack.c.b16 %v458, %v454
        %v575 = vpack.c.b16 %v459, %v455
        %v576 = vpack.c.b16 %v460, %v456
        %v577 = vpack.c.b16 %v461, %v457
        %v578 = vpack.c.b16 %v466, %v462
        %v579 = vpack.c.b16 %v467, %v463
        %v580 = vpack.c.b16 %v468, %v464
        %v581 = vpack.c.b16 %v469, %v465
        %v582 = vpack.c.b16 %v474, %v470
        %v583 = vpack.c.b16 %v475, %v471
        %v584 = vpack.c.b16 %v476, %v472
        %v585 = vpack.c.b16 %v477, %v473
        %v586 = vpack.c.b16 %v482, %v478
        %v587 = vpack.c.b16 %v483, %v479
        %v588 = vpack.c.b16 %v484, %v480
        %v589 = vpack.c.b16 %v485, %v481
        %v590 = vpack.c.b16 %v490, %v486
        %v591 = vpack.c.b16 %v491, %v487
        %v592 = vpack.c.b16 %v492, %v488
        %v593 = vpack.c.b16 %v493, %v489
        %v594 = vpack.c.b16 %v498, %v494
        %v595 = vpack.c.b16 %v499, %v495
        %v596 = vpack.c.b16 %v500, %v496
        %v597 = vpack.c.b16 %v501, %v497
        %v598 = vpack.c.b16 %v506, %v502
        %v599 = vpack.c.b16 %v507, %v503
        %v600 = vpack.c.b16 %v508, %v504
        %v601 = vpack.c.b16 %v509, %v505
        %v602 = vpack.c.b16 %v514, %v510
        %v603 = vpack.c.b16 %v515, %v511
        %v604 = vpack.c.b16 %v516, %v512
        %v605 = vpack.c.b16 %v517, %v513
        %v606 = vpack.c.b16 %v522, %v518
        %v607 = vpack.c.b16 %v523, %v519
        %v608 = vpack.c.b16 %v524, %v520
        %v609 = vpack.c.b16 %v525, %v521
        %v610 = vpack.c.b16 %v530, %v526
        %v611 = vpack.c.b16 %v531, %v527
        %v612 = vpack.c.b16 %v532, %v528
        %v613 = vpack.c.b16 %v533, %v529
        %v614 = vpack.c.b16 %v538, %v534
        %v615 = vpack.c.b16 %v539, %v535
        %v616 = vpack.c.b16 %v540, %v536
        %v617 = vpack.c.b16 %v541, %v537
        %v618 = vpack.c.b16 %v546, %v542
        %v619 = vpack.c.b16 %v547, %v543
        %v620 = vpack.c.b16 %v548, %v544
        %v621 = vpack.c.b16 %v549, %v545
        %v622 = vpack.c.b16 %v554, %v550
        %v623 = vpack.c.b16 %v555, %v551
        %v624 = vpack.c.b16 %v556, %v552
        %v625 = vpack.c.b16 %v557, %v553
        %v626 = vpack.c.b16 %v562, %v558
        %v627 = vpack.c.b16 %v563, %v559
        %v628 = vpack.c.b16 %v564, %v560
        %v629 = vpack.c.b16 %v565, %v561
        %694 = vmatprep.subr.bf16.mxu0 %v567
        %695 = vmatpush1.bf16.msra.mxu0 %v566
        %696 = vmatprep.subr.bf16.mxu0 %v571
        %697 = vmatpush1.bf16.msra.mxu0 %v570
        %698 = vmatprep.subr.bf16.mxu0 %v575
        %699 = vmatpush1.bf16.msra.mxu0 %v574
        %700 = vmatprep.subr.bf16.mxu0 %v579
        %701 = vmatpush1.bf16.msra.mxu0 %v578
        %702 = vmatprep.subr.bf16.mxu0 %v583
        %703 = vmatpush1.bf16.msra.mxu0 %v582
        %704 = vmatprep.subr.bf16.mxu0 %v587
        %705 = vmatpush1.bf16.msra.mxu0 %v586
        %706 = vmatprep.subr.bf16.mxu0 %v591
        %707 = vmatpush1.bf16.msra.mxu0 %v590
        %708 = vmatprep.subr.bf16.mxu0 %v595
        %709 = vmatpush1.bf16.msra.mxu0 %v594
        %710 = vmatprep.subr.bf16.mxu0 %v599
        %711 = vmatpush1.bf16.msra.mxu0 %v598
        %712 = vmatprep.subr.bf16.mxu0 %v603
        %713 = vmatpush1.bf16.msra.mxu0 %v602
        %714 = vmatprep.subr.bf16.mxu0 %v607
        %715 = vmatpush1.bf16.msra.mxu0 %v606
        %716 = vmatprep.subr.bf16.mxu0 %v611
        %717 = vmatpush1.bf16.msra.mxu0 %v610
        %718 = vmatprep.subr.bf16.mxu0 %v615
        %719 = vmatpush1.bf16.msra.mxu0 %v614
        %720 = vmatprep.subr.bf16.mxu0 %v619
        %721 = vmatpush1.bf16.msra.mxu0 %v618
        %722 = vmatprep.subr.bf16.mxu0 %v623
        %723 = vmatpush1.bf16.msra.mxu0 %v622
        %724 = vmatprep.subr.bf16.mxu0 %v627
        %725 = vmatpush1.bf16.msra.mxu0 %v626
        %726 = vmatprep.mubr.bf16.mxu0 %v367
        %727 = vmatmul.mubr.bf16.gmra.mrb[0].mxu0 %v366
        %v728 = vpop.f32.mrb[0].mxu0
        %v729 = vadd.f32 0.0, %v728
        %v730 = vpop.f32.mrb[0].mxu0
        %v731 = vadd.f32 0.0, %v730
        %v732 = vpop.f32.mrb[0].mxu0
        %v733 = vadd.f32 0.0, %v732
        %v734 = vpop.f32.mrb[0].mxu0
        %v735 = vadd.f32 0.0, %v734
        %736 = vmatprep.mubr.bf16.mxu0 %v369
        %737 = vmatmul.mubr.bf16.gmra.mrb[0].mxu0 %v368
        %v738 = vpop.f32.mrb[0].mxu0
        %v739 = vadd.f32 0.0, %v738
        %v740 = vpop.f32.mrb[0].mxu0
        %v741 = vadd.f32 0.0, %v740
        %v742 = vpop.f32.mrb[0].mxu0
        %v743 = vadd.f32 0.0, %v742
        %v744 = vpop.f32.mrb[0].mxu0
        %v745 = vadd.f32 0.0, %v744
        %746 = vdwg.mxu0
        %747 = vmatprep.subr.bf16.mxu0 %v569
        %748 = vmatpush1.bf16.msra.mxu0 %v568
        %749 = vmatprep.subr.bf16.mxu0 %v573
        %750 = vmatpush1.bf16.msra.mxu0 %v572
        %751 = vmatprep.subr.bf16.mxu0 %v577
        %752 = vmatpush1.bf16.msra.mxu0 %v576
        %753 = vmatprep.subr.bf16.mxu0 %v581
        %754 = vmatpush1.bf16.msra.mxu0 %v580
        %755 = vmatprep.subr.bf16.mxu0 %v585
        %756 = vmatpush1.bf16.msra.mxu0 %v584
        %757 = vmatprep.subr.bf16.mxu0 %v589
        %758 = vmatpush1.bf16.msra.mxu0 %v588
        %759 = vmatprep.subr.bf16.mxu0 %v593
        %760 = vmatpush1.bf16.msra.mxu0 %v592
        %761 = vmatprep.subr.bf16.mxu0 %v597
        %762 = vmatpush1.bf16.msra.mxu0 %v596
        %763 = vmatprep.subr.bf16.mxu0 %v601
        %764 = vmatpush1.bf16.msra.mxu0 %v600
        %765 = vmatprep.subr.bf16.mxu0 %v605
        %766 = vmatpush1.bf16.msra.mxu0 %v604
        %767 = vmatprep.subr.bf16.mxu0 %v609
        %768 = vmatpush1.bf16.msra.mxu0 %v608
        %769 = vmatprep.subr.bf16.mxu0 %v613
        %770 = vmatpush1.bf16.msra.mxu0 %v612
        %771 = vmatprep.subr.bf16.mxu0 %v617
        %772 = vmatpush1.bf16.msra.mxu0 %v616
        %773 = vmatprep.subr.bf16.mxu0 %v621
        %774 = vmatpush1.bf16.msra.mxu0 %v620
        %775 = vmatprep.subr.bf16.mxu0 %v625
        %776 = vmatpush1.bf16.msra.mxu0 %v624
        %777 = vmatprep.subr.bf16.mxu0 %v629
        %778 = vmatpush1.bf16.msra.mxu0 %v628
        %779 = vmatprep.mubr.bf16.mxu0 %v367
        %780 = vmatmul.mubr.bf16.gmra.mrb[0].mxu0 %v366
        %v781 = vpop.f32.mrb[0].mxu0
        %v782 = vadd.f32 0.0, %v781
        %v783 = vpop.f32.mrb[0].mxu0
        %v784 = vadd.f32 0.0, %v783
        %v785 = vpop.f32.mrb[0].mxu0
        %v786 = vadd.f32 0.0, %v785
        %v787 = vpop.f32.mrb[0].mxu0
        %v788 = vadd.f32 0.0, %v787
        %789 = vmatprep.mubr.bf16.mxu0 %v369
        %790 = vmatmul.mubr.bf16.gmra.mrb[0].mxu0 %v368
        %v791 = vpop.f32.mrb[0].mxu0
        %v792 = vadd.f32 0.0, %v791
        %v793 = vpop.f32.mrb[0].mxu0
        %v794 = vadd.f32 0.0, %v793
        %v795 = vpop.f32.mrb[0].mxu0
        %v796 = vadd.f32 0.0, %v795
        %v797 = vpop.f32.mrb[0].mxu0
        %v798 = vadd.f32 0.0, %v797
        %799 = vdwg.mxu0
        %v800 = vxor.u32 %v729, 2147483648
        %v801 = vxor.u32 %v731, 2147483648
        %v802 = vxor.u32 %v733, 2147483648
        %v803 = vxor.u32 %v735, 2147483648
        %v804 = vxor.u32 %v739, 2147483648
        %v805 = vxor.u32 %v741, 2147483648
        %v806 = vxor.u32 %v743, 2147483648
        %v807 = vxor.u32 %v745, 2147483648
        %v808 = vmul.f32 %v800, 1.442695
        %v809 = vpow.pop %v808
        %v810 = vmul.f32 %v801, 1.442695
        %v811 = vpow.pop %v810
        %v812 = vmul.f32 %v802, 1.442695
        %v813 = vpow.pop %v812
        %v814 = vmul.f32 %v803, 1.442695
        %v815 = vpow.pop %v814
        %v816 = vmul.f32 %v804, 1.442695
        %v817 = vpow.pop %v816
        %v818 = vmul.f32 %v805, 1.442695
        %v819 = vpow.pop %v818
        %v820 = vmul.f32 %v806, 1.442695
        %v821 = vpow.pop %v820
        %v822 = vmul.f32 %v807, 1.442695
        %v823 = vpow.pop %v822
        %v824 = vadd.f32 %v809, 1.0
        %v825 = vadd.f32 %v811, 1.0
        %v826 = vadd.f32 %v813, 1.0
        %v827 = vadd.f32 %v815, 1.0
        %v828 = vadd.f32 %v817, 1.0
        %v829 = vadd.f32 %v819, 1.0
        %v830 = vadd.f32 %v821, 1.0
        %v831 = vadd.f32 %v823, 1.0
        %v832 = vrcp.pop %v824
        %v833 = vmul.f32 1.0, %v832
        %v834 = vrcp.pop %v825
        %v835 = vmul.f32 1.0, %v834
        %v836 = vrcp.pop %v826
        %v837 = vmul.f32 1.0, %v836
        %v838 = vrcp.pop %v827
        %v839 = vmul.f32 1.0, %v838
        %v840 = vrcp.pop %v828
        %v841 = vmul.f32 1.0, %v840
        %v842 = vrcp.pop %v829
        %v843 = vmul.f32 1.0, %v842
        %v844 = vrcp.pop %v830
        %v845 = vmul.f32 1.0, %v844
        %v846 = vrcp.pop %v831
        %v847 = vmul.f32 1.0, %v846
        %v848 = vmul.f32 %v729, %v833
        %v849 = vmul.f32 %v731, %v835
        %v850 = vmul.f32 %v733, %v837
        %v851 = vmul.f32 %v735, %v839
        %v852 = vmul.f32 %v739, %v841
        %v853 = vmul.f32 %v741, %v843
        %v854 = vmul.f32 %v743, %v845
        %v855 = vmul.f32 %v745, %v847
        %v856 = vmul.f32 %v848, %v782
        %v857 = vmul.f32 %v849, %v784
        %v858 = vmul.f32 %v850, %v786
        %v859 = vmul.f32 %v851, %v788
        %v860 = vmul.f32 %v852, %v792
        %v861 = vmul.f32 %v853, %v794
        %v862 = vmul.f32 %v854, %v796
        %v863 = vmul.f32 %v855, %v798
        %v864 = vpack.c.bf16 %v858, %v856
        %v865 = vpack.c.bf16 %v859, %v857
        %v866 = vpack.c.bf16 %v862, %v860
        %v867 = vpack.c.bf16 %v863, %v861
        %v868 = vld [vmem:[#allocation2] sm:$0xff]
        %v869 = vld [vmem:[#allocation2 + $0x8] sm:$0xff]
        %v870 = vld [vmem:[#allocation2 + $0x10] sm:$0xff]
        %v871 = vld [vmem:[#allocation2 + $0x18] sm:$0xff]
        %v872 = vld [vmem:[#allocation2 + $0x20] sm:$0xff]
        %v873 = vld [vmem:[#allocation2 + $0x28] sm:$0xff]
        %v874 = vld [vmem:[#allocation2 + $0x30] sm:$0xff]
        %v875 = vld [vmem:[#allocation2 + $0x38] sm:$0xff]
        %v876 = vld [vmem:[%s223] sm:$0xff]
        %v877 = vld [vmem:[%s223 + $0x8] sm:$0xff]
        %v878 = vld [vmem:[%s223 + $0x10] sm:$0xff]
        %v879 = vld [vmem:[%s223 + $0x18] sm:$0xff]
        %v880 = vld [vmem:[%s223 + $0x20] sm:$0xff]
        %v881 = vld [vmem:[%s223 + $0x28] sm:$0xff]
        %v882 = vld [vmem:[%s223 + $0x30] sm:$0xff]
        %v883 = vld [vmem:[%s223 + $0x38] sm:$0xff]
        %v884 = vld [vmem:[%s223 + $0x40] sm:$0xff]
        %v885 = vld [vmem:[%s223 + $0x48] sm:$0xff]
        %v886 = vld [vmem:[%s223 + $0x50] sm:$0xff]
        %v887 = vld [vmem:[%s223 + $0x58] sm:$0xff]
        %v888 = vld [vmem:[%s223 + $0x60] sm:$0xff]
        %v889 = vld [vmem:[%s223 + $0x68] sm:$0xff]
        %v890 = vld [vmem:[%s223 + $0x70] sm:$0xff]
        %v891 = vld [vmem:[%s223 + $0x78] sm:$0xff]
        %v892 = vld [vmem:[%s223 + $0x80] sm:$0xff]
        %v893 = vld [vmem:[%s223 + $0x88] sm:$0xff]
        %v894 = vld [vmem:[%s223 + $0x90] sm:$0xff]
        %v895 = vld [vmem:[%s223 + $0x98] sm:$0xff]
        %v896 = vld [vmem:[%s223 + $0xa0] sm:$0xff]
        %v897 = vld [vmem:[%s223 + $0xa8] sm:$0xff]
        %v898 = vld [vmem:[%s223 + $0xb0] sm:$0xff]
        %v899 = vld [vmem:[%s223 + $0xb8] sm:$0xff]
        %v900 = vld [vmem:[%s223 + $0xc0] sm:$0xff]
        %v901 = vld [vmem:[%s223 + $0xc8] sm:$0xff]
        %v902 = vld [vmem:[%s223 + $0xd0] sm:$0xff]
        %v903 = vld [vmem:[%s223 + $0xd8] sm:$0xff]
        %v904 = vld [vmem:[%s223 + $0xe0] sm:$0xff]
        %v905 = vld [vmem:[%s223 + $0xe8] sm:$0xff]
        %v906 = vld [vmem:[%s223 + $0xf0] sm:$0xff]
        %v907 = vld [vmem:[%s223 + $0xf8] sm:$0xff]
        %v940 = vunpack.c.l.b16 %v876
        %v941 = vunpack.c.h.b16 %v876
        %v942 = vunpack.c.l.b16 %v877
        %v943 = vunpack.c.h.b16 %v877
        %v944 = vunpack.c.l.b16 %v878
        %v945 = vunpack.c.h.b16 %v878
        %v946 = vunpack.c.l.b16 %v879
        %v947 = vunpack.c.h.b16 %v879
        %v948 = vunpack.c.l.b16 %v880
        %v949 = vunpack.c.h.b16 %v880
        %v950 = vunpack.c.l.b16 %v881
        %v951 = vunpack.c.h.b16 %v881
        %v952 = vunpack.c.l.b16 %v882
        %v953 = vunpack.c.h.b16 %v882
        %v954 = vunpack.c.l.b16 %v883
        %v955 = vunpack.c.h.b16 %v883
        %v956 = vunpack.c.l.b16 %v884
        %v957 = vunpack.c.h.b16 %v884
        %v958 = vunpack.c.l.b16 %v885
        %v959 = vunpack.c.h.b16 %v885
        %v960 = vunpack.c.l.b16 %v886
        %v961 = vunpack.c.h.b16 %v886
        %v962 = vunpack.c.l.b16 %v887
        %v963 = vunpack.c.h.b16 %v887
        %v964 = vunpack.c.l.b16 %v888
        %v965 = vunpack.c.h.b16 %v888
        %v966 = vunpack.c.l.b16 %v889
        %v967 = vunpack.c.h.b16 %v889
        %v968 = vunpack.c.l.b16 %v890
        %v969 = vunpack.c.h.b16 %v890
        %v970 = vunpack.c.l.b16 %v891
        %v971 = vunpack.c.h.b16 %v891
        %v972 = vunpack.c.l.b16 %v892
        %v973 = vunpack.c.h.b16 %v892
        %v974 = vunpack.c.l.b16 %v893
        %v975 = vunpack.c.h.b16 %v893
        %v976 = vunpack.c.l.b16 %v894
        %v977 = vunpack.c.h.b16 %v894
        %v978 = vunpack.c.l.b16 %v895
        %v979 = vunpack.c.h.b16 %v895
        %v980 = vunpack.c.l.b16 %v896
        %v981 = vunpack.c.h.b16 %v896
        %v982 = vunpack.c.l.b16 %v897
        %v983 = vunpack.c.h.b16 %v897
        %v984 = vunpack.c.l.b16 %v898
        %v985 = vunpack.c.h.b16 %v898
        %v986 = vunpack.c.l.b16 %v899
        %v987 = vunpack.c.h.b16 %v899
        %v988 = vunpack.c.l.b16 %v900
        %v989 = vunpack.c.h.b16 %v900
        %v990 = vunpack.c.l.b16 %v901
        %v991 = vunpack.c.h.b16 %v901
        %v992 = vunpack.c.l.b16 %v902
        %v993 = vunpack.c.h.b16 %v902
        %v994 = vunpack.c.l.b16 %v903
        %v995 = vunpack.c.h.b16 %v903
        %v996 = vunpack.c.l.b16 %v904
        %v997 = vunpack.c.h.b16 %v904
        %v998 = vunpack.c.l.b16 %v905
        %v999 = vunpack.c.h.b16 %v905
        %v1000 = vunpack.c.l.b16 %v906
        %v1001 = vunpack.c.h.b16 %v906
        %v1002 = vunpack.c.l.b16 %v907
        %v1003 = vunpack.c.h.b16 %v907
        %v1004 = vpack.c.b16 %v942, %v940
        %v1005 = vpack.c.b16 %v943, %v941
        %v1006 = vpack.c.b16 %v946, %v944
        %v1007 = vpack.c.b16 %v947, %v945
        %v1008 = vpack.c.b16 %v950, %v948
        %v1009 = vpack.c.b16 %v951, %v949
        %v1010 = vpack.c.b16 %v954, %v952
        %v1011 = vpack.c.b16 %v955, %v953
        %v1012 = vpack.c.b16 %v958, %v956
        %v1013 = vpack.c.b16 %v959, %v957
        %v1014 = vpack.c.b16 %v962, %v960
        %v1015 = vpack.c.b16 %v963, %v961
        %v1016 = vpack.c.b16 %v966, %v964
        %v1017 = vpack.c.b16 %v967, %v965
        %v1018 = vpack.c.b16 %v970, %v968
        %v1019 = vpack.c.b16 %v971, %v969
        %v1020 = vpack.c.b16 %v974, %v972
        %v1021 = vpack.c.b16 %v975, %v973
        %v1022 = vpack.c.b16 %v978, %v976
        %v1023 = vpack.c.b16 %v979, %v977
        %v1024 = vpack.c.b16 %v982, %v980
        %v1025 = vpack.c.b16 %v983, %v981
        %v1026 = vpack.c.b16 %v986, %v984
        %v1027 = vpack.c.b16 %v987, %v985
        %v1028 = vpack.c.b16 %v990, %v988
        %v1029 = vpack.c.b16 %v991, %v989
        %v1030 = vpack.c.b16 %v994, %v992
        %v1031 = vpack.c.b16 %v995, %v993
        %v1032 = vpack.c.b16 %v998, %v996
        %v1033 = vpack.c.b16 %v999, %v997
        %v1034 = vpack.c.b16 %v1002, %v1000
        %v1035 = vpack.c.b16 %v1003, %v1001
        %1068 = vmatprep.subr.bf16.mxu0 %v1005
        %1069 = vmatpush1.bf16.msra.mxu0 %v1004
        %1070 = vmatprep.subr.bf16.mxu0 %v1007
        %1071 = vmatpush1.bf16.msra.mxu0 %v1006
        %1072 = vmatprep.subr.bf16.mxu0 %v1009
        %1073 = vmatpush1.bf16.msra.mxu0 %v1008
        %1074 = vmatprep.subr.bf16.mxu0 %v1011
        %1075 = vmatpush1.bf16.msra.mxu0 %v1010
        %1076 = vmatprep.subr.bf16.mxu0 %v1013
        %1077 = vmatpush1.bf16.msra.mxu0 %v1012
        %1078 = vmatprep.subr.bf16.mxu0 %v1015
        %1079 = vmatpush1.bf16.msra.mxu0 %v1014
        %1080 = vmatprep.subr.bf16.mxu0 %v1017
        %1081 = vmatpush1.bf16.msra.mxu0 %v1016
        %1082 = vmatprep.subr.bf16.mxu0 %v1019
        %1083 = vmatpush1.bf16.msra.mxu0 %v1018
        %1084 = vmatprep.subr.bf16.mxu0 %v1021
        %1085 = vmatpush1.bf16.msra.mxu0 %v1020
        %1086 = vmatprep.subr.bf16.mxu0 %v1023
        %1087 = vmatpush1.bf16.msra.mxu0 %v1022
        %1088 = vmatprep.subr.bf16.mxu0 %v1025
        %1089 = vmatpush1.bf16.msra.mxu0 %v1024
        %1090 = vmatprep.subr.bf16.mxu0 %v1027
        %1091 = vmatpush1.bf16.msra.mxu0 %v1026
        %1092 = vmatprep.subr.bf16.mxu0 %v1029
        %1093 = vmatpush1.bf16.msra.mxu0 %v1028
        %1094 = vmatprep.subr.bf16.mxu0 %v1031
        %1095 = vmatpush1.bf16.msra.mxu0 %v1030
        %1096 = vmatprep.subr.bf16.mxu0 %v1033
        %1097 = vmatpush1.bf16.msra.mxu0 %v1032
        %1098 = vmatprep.subr.bf16.mxu0 %v1035
        %1099 = vmatpush1.bf16.msra.mxu0 %v1034
        %1100 = vmatprep.mubr.bf16.mxu0 %v865
        %1101 = vmatmul.mubr.bf16.gmra.mrb[0].mxu0 %v864
        %v1102 = vpop.f32.mrb[0].mxu0
        %v1103 = vadd.f32 0.0, %v1102
        %v1104 = vpop.f32.mrb[0].mxu0
        %v1105 = vadd.f32 0.0, %v1104
        %v1106 = vpop.f32.mrb[0].mxu0
        %v1107 = vadd.f32 0.0, %v1106
        %v1108 = vpop.f32.mrb[0].mxu0
        %v1109 = vadd.f32 0.0, %v1108
        %1110 = vmatprep.mubr.bf16.mxu0 %v867
        %1111 = vmatmul.mubr.bf16.gmra.mrb[0].mxu0 %v866
        %v1112 = vpop.f32.mrb[0].mxu0
        %v1113 = vadd.f32 0.0, %v1112
        %v1114 = vpop.f32.mrb[0].mxu0
        %v1115 = vadd.f32 0.0, %v1114
        %v1116 = vpop.f32.mrb[0].mxu0
        %v1117 = vadd.f32 0.0, %v1116
        %v1118 = vpop.f32.mrb[0].mxu0
        %v1119 = vadd.f32 0.0, %v1118
        %1120 = vdwg.mxu0
        %v1121 = vadd.f32 %v868, %v1103
        %v1122 = vadd.f32 %v869, %v1105
        %v1123 = vadd.f32 %v870, %v1107
        %v1124 = vadd.f32 %v871, %v1109
        %v1125 = vadd.f32 %v872, %v1113
        %v1126 = vadd.f32 %v873, %v1115
        %v1127 = vadd.f32 %v874, %v1117
        %v1128 = vadd.f32 %v875, %v1119
        %1129 = vst [vmem:[#allocation2] sm:$0xff] %v1121
        %1130 = vst [vmem:[#allocation2 + $0x8] sm:$0xff] %v1122
        %1131 = vst [vmem:[#allocation2 + $0x10] sm:$0xff] %v1123
        %1132 = vst [vmem:[#allocation2 + $0x18] sm:$0xff] %v1124
        %1133 = vst [vmem:[#allocation2 + $0x20] sm:$0xff] %v1125
        %1134 = vst [vmem:[#allocation2 + $0x28] sm:$0xff] %v1126
        %1135 = vst [vmem:[#allocation2 + $0x30] sm:$0xff] %v1127
        %1136 = vst [vmem:[#allocation2 + $0x38] sm:$0xff] %v1128
        %p1137 = scmp.eq.s32.totalorder %s25, 1
        // Predicated region
        $region45: #{qwen2_mlp_packed.1} parent=31 // pred_check
          %p1138 = pneg %p1137
        $region46: #{qwen2_mlp_packed.1} parent=31 // pred_check_branch
          %1140 = sbr.rel (%p1138) target = $region48
        $region47: #{qwen2_mlp_packed.1} parent=31 // pred_region
          %v1141 = vld [vmem:[#allocation2] sm:$0xff]
          %v1142 = vld [vmem:[#allocation2 + $0x8] sm:$0xff]
          %v1143 = vld [vmem:[#allocation2 + $0x10] sm:$0xff]
          %v1144 = vld [vmem:[#allocation2 + $0x18] sm:$0xff]
          %v1145 = vld [vmem:[#allocation2 + $0x20] sm:$0xff]
          %v1146 = vld [vmem:[#allocation2 + $0x28] sm:$0xff]
          %v1147 = vld [vmem:[#allocation2 + $0x30] sm:$0xff]
          %v1148 = vld [vmem:[#allocation2 + $0x38] sm:$0xff]
          %v1149 = vpack.c.bf16 %v1143, %v1141
          %v1150 = vpack.c.bf16 %v1144, %v1142
          %v1151 = vpack.c.bf16 %v1147, %v1145
          %v1152 = vpack.c.bf16 %v1148, %v1146
          %v1157 = vunpack.c.l.b16 %v1149
          %v1158 = vunpack.c.l.b16 %v1150
          %v1159 = vunpack.c.h.b16 %v1149
          %v1160 = vunpack.c.h.b16 %v1150
          %v1161 = vunpack.c.l.b16 %v1151
          %v1162 = vunpack.c.l.b16 %v1152
          %v1163 = vunpack.c.h.b16 %v1151
          %v1164 = vunpack.c.h.b16 %v1152
          %v1165 = vpack.c.b16 %v1158, %v1157
          %v1166 = vpack.c.b16 %v1160, %v1159
          %v1167 = vpack.c.b16 %v1162, %v1161
          %v1168 = vpack.c.b16 %v1164, %v1163
          %1173 = vst [vmem:[%s272] sm:$0xff] %v1165
          %1174 = vst [vmem:[%s272 + $0x8] sm:$0xff] %v1166
          %1175 = vst [vmem:[%s272 + $0x10] sm:$0xff] %v1167
          %1176 = vst [vmem:[%s272 + $0x18] sm:$0xff] %v1168
        $region48: #{qwen2_mlp_packed.1} parent=31 // pred_fallthru
          _
        %s1177 = smul.u32 4, %s24
        %p1178 = scmp.lt.s32.totalorder %s1177, 7
        %s1179 = scalar_select %p1178, %s1177, 7
        %s1180 = smul.addr %s1179, 2
        %s1181 = smul.addr %s1180, 4
        %s1182 = scalar_lea.vmem %s3, %s1181
        // Predicated region
        $region49: #{qwen2_mlp_packed.1} parent=31 // pred_check
          %p1183 = pneg %p128
        $region50: #{qwen2_mlp_packed.1} parent=31 // pred_check_branch
          %1185 = sbr.rel (%p1183) target = $region52
        $region51: #{qwen2_mlp_packed.1} parent=31 // pred_region
          %s1186 = smul.u32 4, %s24
        $region52: #{qwen2_mlp_packed.1} parent=31 // pred_fallthru
          _
      $region32: #{qwen2_mlp_packed.1} parent=5 // pred_fallthru
        _
      %p1187 = scmp.le.s32.totalorder 2, %s15
      // Predicated region
      $region53: #{qwen2_mlp_packed.1} parent=5 // pred_check
        %p1188 = pneg %p1187
      $region54: #{qwen2_mlp_packed.1} parent=5 // pred_check_branch
        %1190 = sbr.rel (%p1188) target = $region56
      $region55: #{qwen2_mlp_packed.1} parent=5 // pred_region
        %s1191 = ssub.s32 %s15, 2
        // Predicated region
        $region57: #{qwen2_mlp_packed.1} parent=55 // pred_check
          %p1192 = pneg %p134
        $region58: #{qwen2_mlp_packed.1} parent=55 // pred_check_branch
          %1194 = sbr.rel (%p1192) target = $region60
        $region59: #{qwen2_mlp_packed.1} parent=55 // pred_region
          %s1195 = smul.u32 4, %s26
          %p1196 = scmp.lt.s32.totalorder %s1195, 7
          %s1197 = scalar_select %p1196, %s1195, 7
          %s1198 = smul.addr %s1197, 2
          %s1199 = smul.addr %s1198, 4
          %s1200 = scalar_lea.vmem %s3, %s1199
        $region60: #{qwen2_mlp_packed.1} parent=55 // pred_fallthru
          _
      $region56: #{qwen2_mlp_packed.1} parent=5 // pred_fallthru
        _
    $region6: #{qwen2_mlp_packed.1} parent=1 // loop_footer
      %s19 = sadd.s32 1, %s15
    $region7: #{qwen2_mlp_packed.1} parent=1 // loop_footer_branch
      %14 = sbr.rel target = $region3
    $region8: #{qwen2_mlp_packed.1} parent=1 // loop_exit
      _
    %1201 = vsyncpa [#allocation4], 1
    %s1202 = scalar_lea.sflag [#allocation4], 1
    %1203 = vsyncpa %s1202, 1
    %1204 = vsyncpa [#allocation6], 1
    %s1205 = scalar_lea.sflag [#allocation6], 1
    %1206 = vsyncpa %s1205, 1

</llo_original>
